<compile_context>
chip_gen: v6e
topology: v6e:2x2x1
jax: 0.10.0
libtpu: 0.0.40
codegen_flags: <defaults>
</compile_context>

<pallas_src>
import functools

import jax
import jax.numpy as jnp
from jax.experimental import pallas as pl
from jax.experimental.pallas import tpu as pltpu


def _add_pe_kernel(x_ref, pe_ref, o_ref):
    # x_ref / o_ref: (tb, tl) or (B, ts, td) tile of the embeddings.
    # pe_ref:        (1, tl) or (1, ts, td) tile of the f32 positional table;
    #                broadcast over the batch axis and cast on the VPU (free
    #                under the HBM roofline; avoids a wrapper-side astype pass).
    o_ref[...] = x_ref[...] + pe_ref[...].astype(x_ref.dtype)


def _round_down(x: int, unit: int) -> int:
    return (x // unit) * unit


def _tpu_generation() -> int:
    """Best-effort TPU generation (5/6/7/...); 0 if unknown."""
    try:
        kind = jax.devices()[0].device_kind.lower()
    except Exception:  # defensive: never fail the forward on a lookup
        return 0
    for g in (7, 6, 5, 4):
        if f"v{g}" in kind:
            return g
    return 0


_SCOPED_VMEM_DEFAULT_BYTES = {4: 16 << 20, 5: 16 << 20, 6: 32 << 20, 7: 32 << 20}


def make_positional_encoding_table(d_model: int, max_seq_len: int) -> jnp.ndarray:
    """Builds the (1, max_seq_len, d_model) sinusoidal table (matches PyTorch init)."""
    position = jnp.arange(max_seq_len, dtype=jnp.float32)[:, None]          # (L, 1)
    i = jnp.arange(0, d_model, 2, dtype=jnp.float32)                        # (ceil(D/2),)
    div_term = jnp.power(10000.0, i / d_model)                              # (ceil(D/2),)
    angles = position / div_term                                            # (L, ceil(D/2))
    pe = jnp.zeros((max_seq_len, d_model), dtype=jnp.float32)
    pe = pe.at[:, 0::2].set(jnp.sin(angles))
    # Guard odd d_model: cosine columns are floor(D/2).
    pe = pe.at[:, 1::2].set(jnp.cos(angles)[:, : d_model // 2])
    return pe[None, :, :]                                                   # (1, L, D)


@functools.partial(
    jax.jit, static_argnames=("t", "block_bytes", "in_place", "min_pallas_bytes")
)
def positional_encoding_forward(
    x: jnp.ndarray,
    pe: jnp.ndarray,
    t: int = None,
    *,
    block_bytes: int = None,
    in_place: bool = False,
    min_pallas_bytes: int = 256 * 1024,
) -> jnp.ndarray:
    """
    Args:
      x:  (B, S, D) embeddings.
      pe: (1, max_seq_len, D) f32 sinusoidal table.
      t:  optional static time-step index (requires S == 1); out-of-range t is
          clamped to max_seq_len - 1, matching the PyTorch module.
      block_bytes: per-tile byte budget for the x/out blocks (static). Default
          is generation-gated: ~6 MiB on v7x, ~2 MiB elsewhere.
      in_place: alias the output onto x's buffer (only useful if x is donated).
      min_pallas_bytes: problems smaller than this use a plain fused XLA add
          (pallas_call launch/grid overhead would dominate).
    Returns:
      (B, S, D) encoded embeddings (dropout in eval mode == identity).

    Dtype note: the add is done in x.dtype (the f32 pe tile is cast in-kernel).
    PyTorch would promote a bf16 x to f32 because the pe buffer is f32; for
    f32 inputs results are identical.
    """
    B, S, D = x.shape
    if pe.ndim != 3 or pe.shape[0] != 1 or pe.shape[2] != D:
        raise ValueError(f"pe must have shape (1, max_seq_len, {D}), got {pe.shape}")
    max_seq_len = pe.shape[1]
    itemsize = jnp.dtype(x.dtype).itemsize

    # ---- decode path (t specified): a (B, 1, D) add is dominated by kernel
    # launch / grid-step cost and has sub-128 lane width; let XLA fuse it. ----
    if t is not None:
        if S != 1:
            raise ValueError(f"When t is specified, seq_len must be 1, got {S}")
        t = min(int(t), max_seq_len - 1)            # clamp, as the PyTorch module does
        pe_t = jax.lax.slice(pe, (0, t, 0), (1, t + 1, D))
        return x + pe_t.astype(x.dtype)

    if S > max_seq_len:
        raise ValueError(f"Sequence length {S} exceeds maximum {max_seq_len}")

    # ---- tiny problems: bypass pallas_call (fixed launch cost dominates). ----
    if B * S * D * itemsize < min_pallas_bytes:
        pe_s = jax.lax.slice(pe, (0, 0, 0), (1, S, D))
        return x + pe_s.astype(x.dtype)

    # ---- generation-gated tiling defaults ----
    gen = _tpu_generation()
    if block_bytes is None:
        # v7x: at 3.2 TB/s a 2 MiB tile is ~1.3 us of traffic, so the ~0.35 us
        # per-grid-step overhead eats ~25% of roofline; 6 MiB amortizes it.
        block_bytes = (6 << 20) if gen >= 7 else (2 << 20)
    budget_elems = max(128, block_bytes // itemsize)
    sub_unit = max(8, 32 // itemsize)               # 8 f32, 16 bf16, 32 int8/fp8

    # Worst-case VMEM: x/out/pe blocks, each double-buffered, plus slack.
    worst_vmem = 6 * block_bytes + (2 << 20)
    scoped_default = _SCOPED_VMEM_DEFAULT_BYTES.get(gen, 16 << 20)
    vmem_limit = worst_vmem if worst_vmem > scoped_default else None
    if vmem_limit is not None and gen >= 7:
        vmem_limit = min(vmem_limit, 60 << 20)      # v7x physical VMEM is 64 MiB

    compiler_params = pltpu.CompilerParams(
        # No reduction axis: both grid axes are independent -> both "parallel"
        # (lets v7x shard across its 2 TensorCores even if one axis has extent 1).
        dimension_semantics=("parallel", "parallel"),
        vmem_limit_bytes=vmem_limit,
    )
    aliases = {0: 0} if in_place else {}

    if B < sub_unit:
        # ---- small-batch path: keep (B, S, D); fill sublanes from S. ----
        per_b_budget = max(1, budget_elems // B)
        td = D if D <= per_b_budget else max(128, _round_down(per_b_budget, 128))
        s_budget = max(1, per_b_budget // td)
        ts = S if (S <= s_budget or S <= 8) else max(8, _round_down(s_budget, 8))
        grid = (pl.cdiv(S, ts), pl.cdiv(D, td))

        # Pass the full pe table (no wrapper slice) when its block is legal
        # (the grid only ever touches rows < S); otherwise slice once.
        if ts % 8 == 0 or ts == max_seq_len:
            pe_in = pe
        else:
            pe_in = jax.lax.slice(pe, (0, 0, 0), (1, S, D))

        return pl.pallas_call(
            _add_pe_kernel,
            out_shape=jax.ShapeDtypeStruct((B, S, D), x.dtype),
            grid_spec=pltpu.PrefetchScalarGridSpec(
                num_scalar_prefetch=0,
                grid=grid,
                in_specs=[
                    pl.BlockSpec((B, ts, td), lambda s, d: (0, s, d)),   # x
                    pl.BlockSpec((1, ts, td), lambda s, d: (0, s, d)),   # pe
                ],
                out_specs=pl.BlockSpec((B, ts, td), lambda s, d: (0, s, d)),
            ),
            compiler_params=compiler_params,
            input_output_aliases=aliases,
        )(x, pe_in)

    # ---- general path: flatten (B, S, D) -> (B, S*D); lane-dense last dim. ----
    L = S * D
    x2 = x.reshape(B, L)

    # Batch (sublane) tile first, then lane tile from the remaining budget, so
    # a block never exceeds ~block_bytes.
    tb = B if B <= sub_unit else sub_unit
    lane_budget = max(128, budget_elems // tb)
    tl = L if L <= lane_budget else max(128, _round_down(lane_budget, 128))
    if tl == L and B > tb:
        # Lane dim did not consume the budget: widen the batch tile.
        extra = budget_elems // max(tl, 1)
        if extra >= B:
            tb = B
        elif extra > tb:
            tb = max(sub_unit, _round_down(extra, sub_unit))
    grid = (pl.cdiv(L, tl), pl.cdiv(B, tb))         # batch innermost -> pe stays resident

    # pe: pass the full flattened table when the lane tile is 128-aligned (the
    # grid only touches the first S*D lanes); otherwise tl == L and a legal
    # full-extent pe block requires its lane dim to equal L, i.e. a slice.
    full_lanes = max_seq_len * D
    if tl % 128 == 0 or tl == full_lanes:
        pe2 = pe.reshape(1, full_lanes)
    else:
        pe2 = jax.lax.slice(pe, (0, 0, 0), (1, S, D)).reshape(1, L)

    out2 = pl.pallas_call(
        _add_pe_kernel,
        out_shape=jax.ShapeDtypeStruct((B, L), x.dtype),
        grid_spec=pltpu.PrefetchScalarGridSpec(
            num_scalar_prefetch=0,
            grid=grid,
            in_specs=[
                pl.BlockSpec((tb, tl), lambda l, b: (b, l)),   # x tile
                pl.BlockSpec((1, tl), lambda l, b: (0, l)),    # pe: constant over b
            ],
            out_specs=pl.BlockSpec((tb, tl), lambda l, b: (b, l)),
        ),
        compiler_params=compiler_params,
        input_output_aliases=aliases,
    )(x2, pe2)

    return out2.reshape(B, S, D)


def _reference(x, pe, t=None):
    if t is None:
        return x + pe[:, : x.shape[1], :].astype(x.dtype)
    t = min(t, pe.shape[1] - 1)
    return x + pe[:, t : t + 1, :].astype(x.dtype)


if __name__ == "__main__":
    # Small deterministic example consistent with the module's forward:
    # x: (batch=2, seq_len=8, d_model=32), max_seq_len=16.
    batch, seq_len, d_model, max_seq_len = 2, 8, 32, 16
    key = jax.random.PRNGKey(0)
    k0, k1, k2, k3, k4 = jax.random.split(key, 5)

    x = jax.random.normal(k0, (batch, seq_len, d_model), dtype=jnp.float32)
    pe = make_positional_encoding_table(d_model, max_seq_len)

    # 1) Small module-consistent shape, forced through the Pallas path
    #    (small-batch 3D layout, single block, grid (1, 1)).
    out = jax.block_until_ready(positional_encoding_forward(x, pe, min_pallas_bytes=0))
    assert out.shape == x.shape and out.dtype == x.dtype
    assert jnp.allclose(out, _reference(x, pe), atol=1e-6, rtol=1e-6)

    # 2) Same shape via the default tiny-problem XLA fallback.
    out_small = jax.block_until_ready(positional_encoding_forward(x, pe))
    assert jnp.allclose(out_small, _reference(x, pe), atol=1e-6, rtol=1e-6)

    # 3) Decode path (t given, S == 1): plain fused XLA add, incl. clamping.
    x_step = jax.random.normal(k1, (batch, 1, d_model), dtype=jnp.float32)
    out_t = jax.block_until_ready(positional_encoding_forward(x_step, pe, t=5))
    assert jnp.allclose(out_t, _reference(x_step, pe, t=5), atol=1e-6, rtol=1e-6)
    out_c = jax.block_until_ready(positional_encoding_forward(x_step, pe, t=max_seq_len + 3))
    assert jnp.allclose(out_c, _reference(x_step, pe, t=max_seq_len + 3), atol=1e-6, rtol=1e-6)

    # 4) Larger shape, flattened 2D path, multi-tile grid (tiny budget forces tiling).
    b2, s2, d2, max2 = 16, 64, 128, 64
    x_big = jax.random.normal(k2, (b2, s2, d2), dtype=jnp.float32)
    pe_big = make_positional_encoding_table(d2, max2)
    out_big = jax.block_until_ready(
        positional_encoding_forward(x_big, pe_big, block_bytes=16 * 1024))
    assert jnp.allclose(out_big, _reference(x_big, pe_big), atol=1e-6, rtol=1e-6)

    # 5) Small-batch 3D path with seq/feature tiling + bf16 (in-kernel pe cast).
    b3, s3, d3, max3 = 4, 64, 256, 128
    x_sb = jax.random.normal(k3, (b3, s3, d3), dtype=jnp.bfloat16)
    pe_sb = make_positional_encoding_table(d3, max3)
    out_sb = jax.block_until_ready(
        positional_encoding_forward(x_sb, pe_sb, block_bytes=64 * 1024, min_pallas_bytes=0))
    assert out_sb.dtype == jnp.bfloat16
    assert jnp.allclose(out_sb.astype(jnp.float32),
                        _reference(x_sb, pe_sb).astype(jnp.float32), atol=1e-2, rtol=1e-2)

    # 6) Non-128-multiple lane extent (exercises the full-extent pe fallback).
    b4, s4, d4, max4 = 16, 24, 40, 32
    x_odd = jax.random.normal(k4, (b4, s4, d4), dtype=jnp.float32)
    pe_odd = make_positional_encoding_table(d4, max4)
    out_odd = jax.block_until_ready(
        positional_encoding_forward(x_odd, pe_odd, min_pallas_bytes=0))
    assert jnp.allclose(out_odd, _reference(x_odd, pe_odd), atol=1e-6, rtol=1e-6)

    # 7) Optional in-place aliasing path (useful when the caller donates x).
    out_ip = jax.block_until_ready(positional_encoding_forward(x_big, pe_big, in_place=True))
    assert jnp.allclose(out_ip, _reference(x_big, pe_big), atol=1e-6, rtol=1e-6)

    print("KERNEL_OK")
</pallas_src>

<mosaic_0001>
module attributes {stable_mosaic.version = 11 : i64} {
  func.func @_add_pe_kernel(%arg0: i32, %arg1: i32, %arg2: memref<2x8x32xf32, #tpu.memory_space<vmem>>, %arg3: memref<1x8x32xf32, #tpu.memory_space<vmem>>, %arg4: memref<2x8x32xf32, #tpu.memory_space<vmem>>) attributes {dimension_semantics = [#tpu.dimension_semantics<parallel>, #tpu.dimension_semantics<parallel>], iteration_bounds = array<i64: 1, 1>, scalar_prefetch = 0 : i64, scratch_operands = 0 : i64, tpu.core_type = #tpu.core_type<tc>, window_params = [{transform_indices = @transform_0, window_bounds = array<i64: 2, 8, 32>}, {transform_indices = @transform_1, window_bounds = array<i64: 1, 8, 32>}, {transform_indices = @transform_2, window_bounds = array<i64: 2, 8, 32>}]} {
    %c0 = arith.constant 0 : index
    %c0_0 = arith.constant 0 : index
    %c0_1 = arith.constant 0 : index
    %0 = vector.load %arg2[%c0, %c0_0, %c0_1] : memref<2x8x32xf32, #tpu.memory_space<vmem>>, vector<2x8x32xf32>
    %c0_2 = arith.constant 0 : index
    %c0_3 = arith.constant 0 : index
    %c0_4 = arith.constant 0 : index
    %1 = vector.load %arg3[%c0_2, %c0_3, %c0_4] : memref<1x8x32xf32, #tpu.memory_space<vmem>>, vector<1x8x32xf32>
    %2 = vector.broadcast %1 : vector<1x8x32xf32> to vector<2x8x32xf32>
    %3 = arith.addf %0, %2 : vector<2x8x32xf32>
    %c0_5 = arith.constant 0 : index
    %c0_6 = arith.constant 0 : index
    %c0_7 = arith.constant 0 : index
    %4 = vector.load %arg4[%c0_5, %c0_6, %c0_7] : memref<2x8x32xf32, #tpu.memory_space<vmem>>, vector<2x8x32xf32>
    tpu.vector_store %arg4[%c0_5, %c0_6, %c0_7], %3 {strides = array<i32>} : memref<2x8x32xf32, #tpu.memory_space<vmem>>, vector<2x8x32xf32>,
    return
  }
  func.func @transform_0(%arg0: i32, %arg1: i32) -> (i32, i32, i32) {
    %c0_i32 = arith.constant 0 : i32
    %c0_i32_0 = arith.constant 0 : i32
    return %c0_i32, %arg0, %arg1 : i32, i32, i32
  }
  func.func @transform_1(%arg0: i32, %arg1: i32) -> (i32, i32, i32) {
    %c0_i32 = arith.constant 0 : i32
    %c0_i32_0 = arith.constant 0 : i32
    return %c0_i32, %arg0, %arg1 : i32, i32, i32
  }
  func.func @transform_2(%arg0: i32, %arg1: i32) -> (i32, i32, i32) {
    %c0_i32 = arith.constant 0 : i32
    %c0_i32_0 = arith.constant 0 : i32
    return %c0_i32, %arg0, %arg1 : i32, i32, i32
  }
}

</mosaic_0001>

<llo_original>
// kernel: positional_encoding_forward.1
$region0: #{positional_encoding_forward.1}
  #allocation0 [shape = 'u32[]', space=smem, size = 0x4, offset = 0x4, fixed_abs, tag = 'smem constant byte address 0x4 - core index']
  #allocation1 [shape = 'u32[144,128]{1,0:T(1,128)}', space=vmem, size = 0x12000, scoped, tag = 'internal scratch']
  %s0 = inlined_call_operand.hbm [shape: f32[2,8,32], index: 0, kind: input, shape index: {}]
  %s1 = inlined_call_operand.hbm [shape: f32[1,16,32], index: 1, kind: input, shape index: {}]
  %s2 = inlined_call_operand.hbm [shape: f32[2,8,32], index: 2, kind: output, shape index: {}]
  %s3 = sld [smem:[#allocation0]]
  $region26: #{positional_encoding_forward.1} parent=0
    _
  %s5 = ssub.s32 1, %s3
  %s6 = scalar_select 0, %s5, %s3
  $region1: #{positional_encoding_forward.1} parent=0
    #allocation2 [shape = 'u8[8192]{0}', space=vmem, size = 0x2000, scoped, tag = 'input window, operand 0, single buffered']
    #allocation3 [shape = 's32[1]{0}', space=sflag, size = 0x4, scoped, tag = 'scoped memory for positional_encoding_forward.1']
    #allocation4 [shape = 's32[1]{0}', space=sflag, size = 0x4, scoped, tag = 'scoped memory for positional_encoding_forward.1']
    #allocation5 [shape = 'u8[4096]{0}', space=vmem, size = 0x1000, scoped, tag = 'input window, operand 1, single buffered']
    #allocation6 [shape = 's32[1]{0}', space=sflag, size = 0x4, scoped, tag = 'scoped memory for positional_encoding_forward.1']
    #allocation7 [shape = 'u8[8192]{0}', space=vmem, size = 0x2000, scoped, tag = 'output window, operand 0, single buffered']
    %7 = vsyncpa [#allocation3], 0
    %8 = vsyncpa [#allocation6], 0
    %9 = vsyncpa [#allocation4], 0
    // Predicated region
    $region2: #{positional_encoding_forward.1} parent=1 // pred_check
      _
    $region3: #{positional_encoding_forward.1} parent=1 // pred_check_branch
      %11 = sbr.rel (0) target = $region5
    $region4: #{positional_encoding_forward.1} parent=1 // pred_region
      %s13 = ssub.s32 256, 256
      %14 = vsyncadd [#allocation3], %s13
      %s15 = sshll.u32 [#allocation2], 4
      %s16 = int_to_ptr.vmem [resolvable:$true] %s15
      %21 = dma.hbm_to_vmem [thread:$0]  %s0, 256, %s16, [#allocation3], 128, 128, 8
    $region5: #{positional_encoding_forward.1} parent=1 // pred_fallthru
      _
    // Predicated region
    $region6: #{positional_encoding_forward.1} parent=1 // pred_check
      _
    $region7: #{positional_encoding_forward.1} parent=1 // pred_check_branch
      %23 = sbr.rel (0) target = $region9
    $region8: #{positional_encoding_forward.1} parent=1 // pred_region
      %s25 = ssub.s32 128, 128
      %26 = vsyncadd [#allocation6], %s25
      %s28 = sshll.u32 [#allocation5], 4
      %s29 = int_to_ptr.vmem [resolvable:$true] %s28
      %31 = dma.hbm_to_vmem [thread:$0]  %s1, 128, %s29, [#allocation6]
    $region9: #{positional_encoding_forward.1} parent=1 // pred_fallthru
      _
    // Predicated region
    $region10: #{positional_encoding_forward.1} parent=1 // pred_check
      _
    $region11: #{positional_encoding_forward.1} parent=1 // pred_check_branch
      %33 = sbr.rel (0) target = $region13
    $region12: #{positional_encoding_forward.1} parent=1 // pred_region
      %34 = dma.done [#allocation3], 256
    $region13: #{positional_encoding_forward.1} parent=1 // pred_fallthru
      _
    // Predicated region
    $region14: #{positional_encoding_forward.1} parent=1 // pred_check
      _
    $region15: #{positional_encoding_forward.1} parent=1 // pred_check_branch
      %36 = sbr.rel (0) target = $region17
    $region16: #{positional_encoding_forward.1} parent=1 // pred_region
      %37 = dma.done [#allocation6], 128
    $region17: #{positional_encoding_forward.1} parent=1 // pred_fallthru
      _
    %v38 = vld [vmem:[#allocation2] sm:$0xff]
    %v39 = vld [vmem:[#allocation2 + $0x8] sm:$0xff]
    %v40 = vld [vmem:[#allocation5] sm:$0xff]
    %v41 = vadd.f32 %v38, %v40
    %v42 = vadd.f32 %v39, %v40
    %vm43 = vcmask 261120
    %44 = vst.msk [vmem:[#allocation7] sm:$0xff] %vm43, %v41
    %45 = vst.msk [vmem:[#allocation7 + $0x8] sm:$0xff] %vm43, %v42
    // Predicated region
    $region18: #{positional_encoding_forward.1} parent=1 // pred_check
      _
    $region19: #{positional_encoding_forward.1} parent=1 // pred_check_branch
      %47 = sbr.rel (0) target = $region21
    $region20: #{positional_encoding_forward.1} parent=1 // pred_region
      %s49 = ssub.s32 256, 256
      %50 = vsyncadd [#allocation4], %s49
      %s51 = sshll.u32 [#allocation7], 4
      %s52 = int_to_ptr.vmem [resolvable:$true] %s51
      %57 = dma.vmem_to_hbm [thread:$0]  %s52, 256, %s2, [#allocation4], 128, 128, 8
    $region21: #{positional_encoding_forward.1} parent=1 // pred_fallthru
      _
    // Predicated region
    $region22: #{positional_encoding_forward.1} parent=1 // pred_check
      _
    $region23: #{positional_encoding_forward.1} parent=1 // pred_check_branch
      %59 = sbr.rel (0) target = $region25
    $region24: #{positional_encoding_forward.1} parent=1 // pred_region
      %60 = dma.done [#allocation4], 256
    $region25: #{positional_encoding_forward.1} parent=1 // pred_fallthru
      _
    %61 = vsyncpa [#allocation3], 1
    %62 = vsyncpa [#allocation6], 1
    %63 = vsyncpa [#allocation4], 1

</llo_original>
